<compile_context>
chip_gen: v7x
topology: tpu7x:2x2x1
jax: 0.10.0
libtpu: 0.0.40
codegen_flags: <defaults>
</compile_context>

<pallas_src>
import functools
import math

import jax
import jax.numpy as jnp
from jax import lax
from jax.experimental import pallas as pl
from jax.experimental.pallas import tpu as pltpu


# ---------------------------------------------------------------------------
# Generation-aware budgets (v7x: 64 MiB physical VMEM; v5e/v6e: 128 MiB).
# ---------------------------------------------------------------------------
def _vmem_limit_bytes():
    try:
        cap = int(getattr(pltpu.get_tpu_info(), "vmem_capacity_bytes", 64 << 20))
    except Exception:
        cap = 64 << 20
    if cap <= (64 << 20):
        return 40 << 20        # v7x: leave headroom for Mosaic internal scratch
    return 100 << 20           # v5e / v6e: use the larger VMEM for bigger tiles


_VMEM_LIMIT = _vmem_limit_bytes()
_TM = 256 if _VMEM_LIMIT <= (40 << 20) else 512   # activation rows per grid step
_RESIDENT_W_BYTES = 16 << 20   # weight-resident threshold (BERT-large wi ~8 MB bf16)


def _tile(dim, target, align):
    """Largest power-of-two tile <= target that divides `dim` and respects the
    alignment; otherwise fall back to the full dimension."""
    t = target
    while t >= align:
        if dim % t == 0:
            return t
        t //= 2
    return dim


def _pad_rows(x, mult=16):
    """Pad the leading (row) dim up to a multiple of `mult` (bf16 sublane pack)."""
    m = x.shape[0]
    pad = (-m) % mult
    if pad:
        x = jnp.pad(x, ((0, pad),) + ((0, 0),) * (x.ndim - 1))
    return x, m


def _gelu(y):
    # TODO(synk): HF/PyTorch BERT uses exact erf-GELU; tanh approximation here.
    c = jnp.float32(math.sqrt(2.0 / math.pi))
    return 0.5 * y * (1.0 + jnp.tanh(c * (y + 0.044715 * y * y * y)))


# ---------------------------------------------------------------------------
# Pallas kernels
# ---------------------------------------------------------------------------

def _linear_kernel(x_ref, w_ref, b_ref, o_ref, *, act):
    # Weight-resident path: the full (N, K) weight block index is constant
    # across the grid, so it is DMA'd once and stays in VMEM.
    y = lax.dot_general(x_ref[...], w_ref[...], (((1,), (1,)), ((), ())),
                        preferred_element_type=jnp.float32)
    y = y + b_ref[...].astype(jnp.float32)
    if act == "gelu":
        y = _gelu(y)
    elif act == "tanh":
        y = jnp.tanh(y)
    o_ref[...] = y.astype(o_ref.dtype)


def _linear_acc_kernel(x_ref, w_ref, b_ref, o_ref, acc_ref, *, act):
    # Fallback for weights too large to keep resident: K-tiled accumulate.
    k = pl.program_id(2)

    @pl.when(k == 0)
    def _():
        acc_ref[...] = jnp.zeros_like(acc_ref)

    acc_ref[...] += lax.dot_general(x_ref[...], w_ref[...],
                                    (((1,), (1,)), ((), ())),
                                    preferred_element_type=jnp.float32)

    @pl.when(k == pl.num_programs(2) - 1)
    def _():
        y = acc_ref[...] + b_ref[...].astype(jnp.float32)
        if act == "gelu":
            y = _gelu(y)
        elif act == "tanh":
            y = jnp.tanh(y)
        o_ref[...] = y.astype(o_ref.dtype)


def pallas_linear(x, w, b, act="none", out_dtype=jnp.bfloat16):
    """y = act(x @ W^T + b).  W is PyTorch (N, K) layout; x is (M, K) bf16."""
    x = x.astype(jnp.bfloat16)
    x, m_real = _pad_rows(x, 16)
    M, K = x.shape
    N = w.shape[0]
    tm = _tile(M, _TM, 16)

    if N * K * w.dtype.itemsize <= _RESIDENT_W_BYTES:
        out = pl.pallas_call(
            functools.partial(_linear_kernel, act=act),
            out_shape=jax.ShapeDtypeStruct((M, N), out_dtype),
            grid=(M // tm,),
            in_specs=[
                pl.BlockSpec((tm, K), lambda i: (i, 0)),
                pl.BlockSpec((N, K), lambda i: (0, 0)),     # resident weight
                pl.BlockSpec((1, N), lambda i: (0, 0)),
            ],
            out_specs=pl.BlockSpec((tm, N), lambda i: (i, 0)),
            compiler_params=pltpu.CompilerParams(
                dimension_semantics=("parallel",),
                vmem_limit_bytes=_VMEM_LIMIT),
        )(x, w, b.reshape(1, N))
    else:
        tn = _tile(N, 256, 128)
        tk = _tile(K, 512, 128)
        out = pl.pallas_call(
            functools.partial(_linear_acc_kernel, act=act),
            out_shape=jax.ShapeDtypeStruct((M, N), out_dtype),
            grid=(M // tm, N // tn, K // tk),
            in_specs=[
                pl.BlockSpec((tm, tk), lambda i, j, k: (i, k)),
                pl.BlockSpec((tn, tk), lambda i, j, k: (j, k)),
                pl.BlockSpec((1, tn), lambda i, j, k: (0, j)),
            ],
            out_specs=pl.BlockSpec((tm, tn), lambda i, j, k: (i, j)),
            scratch_shapes=[pltpu.VMEM((tm, tn), jnp.float32)],
            compiler_params=pltpu.CompilerParams(
                dimension_semantics=("parallel", "parallel", "arbitrary"),
                vmem_limit_bytes=_VMEM_LIMIT),
        )(x, w, b.reshape(1, N))
    return out[:m_real]


def _linear_res_ln_kernel(x_ref, w_ref, b_ref, r_ref, g_ref, bb_ref, o_ref, *, eps):
    y = lax.dot_general(x_ref[...], w_ref[...], (((1,), (1,)), ((), ())),
                        preferred_element_type=jnp.float32)
    y = (y + b_ref[...].astype(jnp.float32) + r_ref[...].astype(jnp.float32))
    # One-pass mean / variance (E[x], E[x^2]) over the full hidden dim.
    mu = jnp.mean(y, axis=-1, keepdims=True)
    var = jnp.mean(y * y, axis=-1, keepdims=True) - mu * mu
    yn = (y - mu) * lax.rsqrt(var + eps)
    o_ref[...] = (yn * g_ref[...].astype(jnp.float32)
                  + bb_ref[...].astype(jnp.float32)).astype(o_ref.dtype)


def pallas_linear_res_ln(x, w, b, res, gamma, beta, eps=1e-12):
    """y = LayerNorm(x @ W^T + b + res); full N and K blocks, weight resident."""
    x = x.astype(jnp.bfloat16)
    res = res.astype(jnp.bfloat16)
    x, m_real = _pad_rows(x, 16)
    res, _ = _pad_rows(res, 16)
    M, K = x.shape
    N = w.shape[0]
    tm = _tile(M, _TM, 16)
    out = pl.pallas_call(
        functools.partial(_linear_res_ln_kernel, eps=eps),
        out_shape=jax.ShapeDtypeStruct((M, N), jnp.bfloat16),
        grid=(M // tm,),
        in_specs=[
            pl.BlockSpec((tm, K), lambda i: (i, 0)),
            pl.BlockSpec((N, K), lambda i: (0, 0)),          # resident weight
            pl.BlockSpec((1, N), lambda i: (0, 0)),
            pl.BlockSpec((tm, N), lambda i: (i, 0)),          # residual
            pl.BlockSpec((1, N), lambda i: (0, 0)),
            pl.BlockSpec((1, N), lambda i: (0, 0)),
        ],
        out_specs=pl.BlockSpec((tm, N), lambda i: (i, 0)),
        compiler_params=pltpu.CompilerParams(
            dimension_semantics=("parallel",),
            vmem_limit_bytes=_VMEM_LIMIT),
    )(x, w, b.reshape(1, N), res, gamma.reshape(1, N), beta.reshape(1, N))
    return out[:m_real]


def _emb_ln_kernel(we_ref, pt_ref, g_ref, b_ref, o_ref, *, eps):
    # Fused embedding sum (word + pos + type) + LayerNorm.
    x = we_ref[0].astype(jnp.float32) + pt_ref[...].astype(jnp.float32)
    mu = jnp.mean(x, axis=-1, keepdims=True)
    var = jnp.mean(x * x, axis=-1, keepdims=True) - mu * mu
    y = (x - mu) * lax.rsqrt(var + eps)
    o_ref[0] = (y * g_ref[...].astype(jnp.float32)
                + b_ref[...].astype(jnp.float32)).astype(o_ref.dtype)


def pallas_embed_layernorm(word_gathered, pos_type, gamma, beta, eps=1e-12):
    B, S, H = word_gathered.shape
    return pl.pallas_call(
        functools.partial(_emb_ln_kernel, eps=eps),
        out_shape=jax.ShapeDtypeStruct((B, S, H), jnp.bfloat16),
        grid=(B,),
        in_specs=[
            pl.BlockSpec((1, S, H), lambda b: (b, 0, 0)),
            pl.BlockSpec((S, H), lambda b: (0, 0)),
            pl.BlockSpec((1, H), lambda b: (0, 0)),
            pl.BlockSpec((1, H), lambda b: (0, 0)),
        ],
        out_specs=pl.BlockSpec((1, S, H), lambda b: (b, 0, 0)),
        compiler_params=pltpu.CompilerParams(
            dimension_semantics=("parallel",),
            vmem_limit_bytes=_VMEM_LIMIT),
    )(word_gathered, pos_type, gamma.reshape(1, H), beta.reshape(1, H))


def _attn_kernel(qkv_ref, o_ref, *, nh, hd, scale):
    H = nh * hd
    qkv = qkv_ref[0]                                        # (S, 3H) bf16 in VMEM
    q = (qkv[:, 0:H].astype(jnp.float32) * scale).astype(jnp.bfloat16)
    k = qkv[:, H:2 * H]
    v = qkv[:, 2 * H:3 * H]
    ctx = []
    # TODO(synk): for S >= 512 switch to Sk-tiled (flash/online-softmax) to bound
    # the (S, S) score intermediate; full scores are fine at BERT-base sizes.
    for h in range(nh):          # static unroll; all head work stays in VMEM
        qh = q[:, h * hd:(h + 1) * hd]
        kh = k[:, h * hd:(h + 1) * hd]
        vh = v[:, h * hd:(h + 1) * hd]
        s = lax.dot_general(qh, kh, (((1,), (1,)), ((), ())),
                            preferred_element_type=jnp.float32)     # (S, S)
        s = s - jnp.max(s, axis=-1, keepdims=True)
        # TODO(synk): on v6e/v7x the exp could run on bf16 (bf16 EUP) for ~2x
        # transcendental throughput; kept f32 so v5e (no bf16 EUP) stays correct.
        p = jnp.exp(s)
        p = p * pl.reciprocal(jnp.sum(p, axis=-1, keepdims=True), approx=True)
        ctx.append(jnp.dot(p.astype(jnp.bfloat16), vh,
                           preferred_element_type=jnp.float32))      # (S, hd)
    # Single lane-dense (S, H) store back in (B*S, H) layout: no XLA head merge.
    o_ref[0] = jnp.concatenate(ctx, axis=-1).astype(o_ref.dtype)


def pallas_attention(qkv, B, S, nh, hd):
    """qkv: (B*S, 3H) with columns [Q | K | V].  Returns (B*S, H) bf16 context."""
    H = nh * hd
    qkv3 = qkv.reshape(B, S, 3 * H)          # free view, no transpose / no split
    scale = 1.0 / math.sqrt(hd)
    out = pl.pallas_call(
        functools.partial(_attn_kernel, nh=nh, hd=hd, scale=scale),
        out_shape=jax.ShapeDtypeStruct((B, S, H), jnp.bfloat16),
        grid=(B,),
        in_specs=[pl.BlockSpec((1, S, 3 * H), lambda b: (b, 0, 0))],
        out_specs=pl.BlockSpec((1, S, H), lambda b: (b, 0, 0)),
        compiler_params=pltpu.CompilerParams(
            dimension_semantics=("parallel",),
            vmem_limit_bytes=_VMEM_LIMIT),
    )(qkv3)
    return out.reshape(B * S, H)


# ---------------------------------------------------------------------------
# Parameter init (deterministic, synthetic — no checkpoint loading)
# ---------------------------------------------------------------------------

def init_params(key, cfg):
    H, I = cfg["hidden"], cfg["inter"]
    ks = iter(jax.random.split(key, 256))

    def nrm(shape):
        return (0.02 * jax.random.normal(next(ks), shape)).astype(jnp.float32)

    p = {
        "word_emb": nrm((cfg["vocab"], H)),
        "pos_emb": nrm((cfg["max_pos"], H)),
        "type_emb": nrm((2, H)),
        "emb_ln_g": jnp.ones((H,), jnp.float32),
        "emb_ln_b": jnp.zeros((H,), jnp.float32),
        "layers": [],
    }
    for _ in range(cfg["layers"]):
        wq, wk, wv = nrm((H, H)), nrm((H, H)), nrm((H, H))
        l = {
            # Fused Q/K/V projection weight (3H, H): x is read from HBM once.
            "wqkv": jnp.concatenate([wq, wk, wv], axis=0).astype(jnp.bfloat16),
            "bqkv": jnp.zeros((3 * H,), jnp.float32),
            "wo": nrm((H, H)).astype(jnp.bfloat16),
            "bo": jnp.zeros((H,), jnp.float32),
            "wi": nrm((I, H)).astype(jnp.bfloat16),
            "bi": jnp.zeros((I,), jnp.float32),
            "wf": nrm((H, I)).astype(jnp.bfloat16),
            "bf": jnp.zeros((H,), jnp.float32),
            "ln1_g": jnp.ones((H,), jnp.float32), "ln1_b": jnp.zeros((H,), jnp.float32),
            "ln2_g": jnp.ones((H,), jnp.float32), "ln2_b": jnp.zeros((H,), jnp.float32),
        }
        p["layers"].append(l)
    p["pool_w"] = nrm((H, H)).astype(jnp.bfloat16)
    p["pool_b"] = jnp.zeros((H,), jnp.float32)

    # Classifier: pad output dim to 128 lanes (unmasked stores), slice outside.
    nc = cfg["num_classes"]
    nc_pad = ((nc + 127) // 128) * 128
    fc_w = nrm((nc, H))
    p["fc_w"] = jnp.pad(fc_w, ((0, nc_pad - nc), (0, 0))).astype(jnp.bfloat16)
    p["fc_b"] = jnp.zeros((nc_pad,), jnp.float32)
    return p


# ---------------------------------------------------------------------------
# Forward pass (mirrors Bert.forward: sentence, cls = bert(text); fc(cls))
# ---------------------------------------------------------------------------

def bert_forward(params, text, text_lengths, cfg):
    # text_lengths accepted for signature parity with the PyTorch module; like
    # the reference forward it is unused (no attention mask applied).
    del text_lengths
    B, S = text.shape
    H, nh = cfg["hidden"], cfg["heads"]
    hd = H // nh

    # Embedding gathers are XLA glue; the sum + LayerNorm is fused in Pallas.
    word = params["word_emb"][text]                               # (B, S, H) f32
    pos_type = params["pos_emb"][:S] + params["type_emb"][0][None, :]   # (S, H)
    x = pallas_embed_layernorm(word, pos_type,
                               params["emb_ln_g"], params["emb_ln_b"])
    x = x.reshape(B * S, H)                                       # bf16

    for l in params["layers"]:
        qkv = pallas_linear(x, l["wqkv"], l["bqkv"])              # (M, 3H) bf16
        ctx = pallas_attention(qkv, B, S, nh, hd)                 # (M, H) bf16
        # Output projection fused with residual add + LayerNorm
        x = pallas_linear_res_ln(ctx, l["wo"], l["bo"], x, l["ln1_g"], l["ln1_b"])
        # FFN: up-projection + GELU, then down-projection fused with add + LN
        inter = pallas_linear(x, l["wi"], l["bi"], act="gelu")
        x = pallas_linear_res_ln(inter, l["wf"], l["bf"], x, l["ln2_g"], l["ln2_b"])

    sequence = x.reshape(B, S, H)          # "sentence" output (unused downstream)
    cls_tok = sequence[:, 0, :]            # [CLS] token, (B, H) bf16
    pooled = pallas_linear(cls_tok, params["pool_w"], params["pool_b"], act="tanh")
    logits = pallas_linear(pooled, params["fc_w"], params["fc_b"],
                           out_dtype=jnp.float32)                 # (B, 128-pad)
    return logits[:, :cfg["num_classes"]]


# ---------------------------------------------------------------------------

if __name__ == "__main__":
    cfg = dict(vocab=100, hidden=32, heads=4, layers=2, inter=64,
               max_pos=16, num_classes=3)
    B, S = 2, 16

    key = jax.random.PRNGKey(0)
    params = init_params(key, cfg)

    text = jax.random.randint(jax.random.fold_in(key, 999), (B, S),
                              0, cfg["vocab"], dtype=jnp.int32)
    text_lengths = jnp.full((B,), S, dtype=jnp.int32)

    out = bert_forward(params, text, text_lengths, cfg)
    out = jax.block_until_ready(out)

    assert out.shape == (B, cfg["num_classes"]), out.shape
    assert out.dtype == jnp.float32
    assert bool(jnp.all(jnp.isfinite(out)))
    print("KERNEL_OK")
</pallas_src>

<mosaic_0001>
module attributes {stable_mosaic.version = 11 : i64} {
  func.func @_emb_ln_kernel(%arg0: i32, %arg1: memref<1x16x32xf32, #tpu.memory_space<vmem>>, %arg2: memref<16x32xf32, #tpu.memory_space<vmem>>, %arg3: memref<1x32xf32, #tpu.memory_space<vmem>>, %arg4: memref<1x32xf32, #tpu.memory_space<vmem>>, %arg5: memref<1x16x32xbf16, #tpu.memory_space<vmem>>) attributes {dimension_semantics = [#tpu.dimension_semantics<parallel>], iteration_bounds = array<i64: 2>, scalar_prefetch = 0 : i64, scratch_operands = 0 : i64, tpu.core_type = #tpu.core_type<tc>, window_params = [{transform_indices = @transform_0, window_bounds = array<i64: 1, 16, 32>}, {pipeline_mode = #tpu.pipeline_mode<synchronous>, transform_indices = @transform_1, window_bounds = array<i64: 16, 32>}, {pipeline_mode = #tpu.pipeline_mode<synchronous>, transform_indices = @transform_2, window_bounds = array<i64: 1, 32>}, {pipeline_mode = #tpu.pipeline_mode<synchronous>, transform_indices = @transform_3, window_bounds = array<i64: 1, 32>}, {transform_indices = @transform_4, window_bounds = array<i64: 1, 16, 32>}]} {
    %c0 = arith.constant 0 : index
    %c0_0 = arith.constant 0 : index
    %c0_1 = arith.constant 0 : index
    %0 = vector.load %arg1[%c0, %c0_0, %c0_1] : memref<1x16x32xf32, #tpu.memory_space<vmem>>, vector<1x16x32xf32>
    %1 = vector.shape_cast %0 : vector<1x16x32xf32> to vector<16x32xf32>
    %c0_2 = arith.constant 0 : index
    %c0_3 = arith.constant 0 : index
    %2 = vector.load %arg2[%c0_2, %c0_3] : memref<16x32xf32, #tpu.memory_space<vmem>>, vector<16x32xf32>
    %3 = arith.addf %1, %2 : vector<16x32xf32>
    %cst = arith.constant dense<0.000000e+00> : vector<16xf32>
    %4 = vector.multi_reduction <add>, %3, %cst [1] : vector<16x32xf32> to vector<16xf32>
    %5 = vector.shape_cast %4 : vector<16xf32> to vector<16x1xf32>
    %cst_4 = arith.constant 3.200000e+01 : f32
    %6 = vector.broadcast %cst_4 : f32 to vector<16x1xf32>
    %7 = arith.divf %5, %6 : vector<16x1xf32>
    %8 = arith.mulf %3, %3 : vector<16x32xf32>
    %cst_5 = arith.constant dense<0.000000e+00> : vector<16xf32>
    %9 = vector.multi_reduction <add>, %8, %cst_5 [1] : vector<16x32xf32> to vector<16xf32>
    %10 = vector.shape_cast %9 : vector<16xf32> to vector<16x1xf32>
    %cst_6 = arith.constant 3.200000e+01 : f32
    %11 = vector.broadcast %cst_6 : f32 to vector<16x1xf32>
    %12 = arith.divf %10, %11 : vector<16x1xf32>
    %13 = arith.mulf %7, %7 : vector<16x1xf32>
    %14 = arith.subf %12, %13 : vector<16x1xf32>
    %15 = vector.broadcast %7 : vector<16x1xf32> to vector<16x32xf32>
    %16 = arith.subf %3, %15 : vector<16x32xf32>
    %cst_7 = arith.constant 9.99999996E-13 : f32
    %17 = vector.broadcast %cst_7 : f32 to vector<16x1xf32>
    %18 = arith.addf %14, %17 : vector<16x1xf32>
    %19 = math.rsqrt %18 : vector<16x1xf32>
    %20 = vector.broadcast %19 : vector<16x1xf32> to vector<16x32xf32>
    %21 = arith.mulf %16, %20 : vector<16x32xf32>
    %c0_8 = arith.constant 0 : index
    %c0_9 = arith.constant 0 : index
    %22 = vector.load %arg3[%c0_8, %c0_9] : memref<1x32xf32, #tpu.memory_space<vmem>>, vector<1x32xf32>
    %23 = vector.broadcast %22 : vector<1x32xf32> to vector<16x32xf32>
    %24 = arith.mulf %21, %23 : vector<16x32xf32>
    %c0_10 = arith.constant 0 : index
    %c0_11 = arith.constant 0 : index
    %25 = vector.load %arg4[%c0_10, %c0_11] : memref<1x32xf32, #tpu.memory_space<vmem>>, vector<1x32xf32>
    %26 = vector.broadcast %25 : vector<1x32xf32> to vector<16x32xf32>
    %27 = arith.addf %24, %26 : vector<16x32xf32>
    %28 = arith.truncf %27 : vector<16x32xf32> to vector<16x32xbf16>
    %c0_12 = arith.constant 0 : index
    %c0_13 = arith.constant 0 : index
    %c0_14 = arith.constant 0 : index
    %29 = vector.load %arg5[%c0_12, %c0_13, %c0_14] : memref<1x16x32xbf16, #tpu.memory_space<vmem>>, vector<1x16x32xbf16>
    %30 = vector.shape_cast %29 : vector<1x16x32xbf16> to vector<16x32xbf16>
    %31 = vector.shape_cast %28 : vector<16x32xbf16> to vector<1x16x32xbf16>
    tpu.vector_store %arg5[%c0_12, %c0_13, %c0_14], %31 {strides = array<i32>} : memref<1x16x32xbf16, #tpu.memory_space<vmem>>, vector<1x16x32xbf16>,
    return
  }
  func.func @transform_0(%arg0: i32) -> (i32, i32, i32) {
    %c0_i32 = arith.constant 0 : i32
    %c0_i32_0 = arith.constant 0 : i32
    %c0_i32_1 = arith.constant 0 : i32
    return %arg0, %c0_i32, %c0_i32_0 : i32, i32, i32
  }
  func.func @transform_1(%arg0: i32) -> (i32, i32) {
    %c0_i32 = arith.constant 0 : i32
    %c0_i32_0 = arith.constant 0 : i32
    %c0_i32_1 = arith.constant 0 : i32
    return %c0_i32, %c0_i32_0 : i32, i32
  }
  func.func @transform_2(%arg0: i32) -> (i32, i32) {
    %c0_i32 = arith.constant 0 : i32
    %c0_i32_0 = arith.constant 0 : i32
    %c0_i32_1 = arith.constant 0 : i32
    return %c0_i32, %c0_i32_0 : i32, i32
  }
  func.func @transform_3(%arg0: i32) -> (i32, i32) {
    %c0_i32 = arith.constant 0 : i32
    %c0_i32_0 = arith.constant 0 : i32
    %c0_i32_1 = arith.constant 0 : i32
    return %c0_i32, %c0_i32_0 : i32, i32
  }
  func.func @transform_4(%arg0: i32) -> (i32, i32, i32) {
    %c0_i32 = arith.constant 0 : i32
    %c0_i32_0 = arith.constant 0 : i32
    %c0_i32_1 = arith.constant 0 : i32
    return %arg0, %c0_i32, %c0_i32_0 : i32, i32, i32
  }
}

</mosaic_0001>

<llo_original>
// kernel: tpu_custom_call.1
$region0: #{tpu_custom_call.1}
  #allocation0 [shape = 'u32[]', space=smem, size = 0x4, offset = 0x4, fixed_abs, tag = 'smem constant byte address 0x4 - core index']
  #allocation1 [shape = 'u32[144,128]{1,0:T(1,128)}', space=vmem, size = 0x12000, scoped, tag = 'internal scratch']
  %s0 = inlined_call_operand.hbm [shape: f32[2,16,32], index: 0, kind: input, shape index: {}]
  %s1 = inlined_call_operand.hbm [shape: f32[16,32], index: 1, kind: input, shape index: {}]
  %s2 = inlined_call_operand.vmem [shape: f32[1,32], index: 2, kind: input, shape index: {}]
  %s3 = inlined_call_operand.vmem [shape: f32[1,32], index: 3, kind: input, shape index: {}]
  %s4 = inlined_call_operand.hbm [shape: bf16[2,16,32], index: 4, kind: output, shape index: {}]
  %s5 = sld [smem:[#allocation0]]
  $region57: #{tpu_custom_call.1} parent=0
    _
  %s7 = ssub.s32 1, %s5
  %s8 = scalar_select 0, %s7, %s5
  $region1: #{tpu_custom_call.1} parent=0
    #allocation2 [shape = 'u8[16384]{0}', space=vmem, size = 0x4000, scoped, tag = 'input window, operand 0']
    #allocation3 [shape = 's32[2]{0}', space=sflag, size = 0x8, scoped, tag = 'scoped memory for tpu_custom_call.1']
    #allocation4 [shape = 's32[2]{0}', space=sflag, size = 0x8, scoped, tag = 'scoped memory for tpu_custom_call.1']
    #allocation5 [shape = 'u8[8192]{0}', space=vmem, size = 0x2000, scoped, tag = 'input window, operand 1, single buffered']
    #allocation6 [shape = 's32[1]{0}', space=sflag, size = 0x4, scoped, tag = 'scoped memory for tpu_custom_call.1']
    #allocation7 [shape = 'u8[8192]{0}', space=vmem, size = 0x2000, scoped, tag = 'output window, operand 0']
    %9 = vsyncpa [#allocation3], 0
    %s10 = scalar_lea.sflag [#allocation3], 1
    %11 = vsyncpa %s10, 0
    %12 = vsyncpa [#allocation6], 0
    %13 = vsyncpa [#allocation4], 0
    %s14 = scalar_lea.sflag [#allocation4], 1
    %15 = vsyncpa %s14, 0
    loop: start=0, step=1, limit=4
    $region2: #{tpu_custom_call.1} parent=1 // loop_pre_header
      _
    $region3: #{tpu_custom_call.1} parent=1 // loop_header
      %s17 = sphi 0, %s21
      %p18 = scmp.ge.s32.totalorder %s17, 4
      %s27 = sphi 0, %s29
      %s30 = sphi 0, %s27
      %s31 = sphi 0, %s30
      %s47 = sphi 0, %s31
      %s51 = sphi 0, %s51
      %s53 = sphi 0, %s51
      %s54 = sphi 0, %s53
      %s68 = sphi 0, %s54
      %s72 = sphi 0, %s72
      %s74 = sphi 0, %s72
      %s75 = sphi 0, %s74
      %s89 = sphi 0, %s75
      %s93 = sphi 0, %s93
      %s95 = sphi 0, %s93
      %s96 = sphi 0, %s95
      %s110 = sphi 0, %s96
      %s116 = sphi 0, %s118
      %s119 = sphi 0, %s116
      %s120 = sphi 0, %s119
      %s136 = sphi 0, %s120
    $region4: #{tpu_custom_call.1} parent=1 // loop_header_branch
      %20 = sbr.rel (%p18) target = $region8
    $region5: #{tpu_custom_call.1} parent=1 // loop_body
      %s22 = ssub.s32 %s17, 1
      %s23 = ssub.s32 %s17, 2
      %s24 = sadd.s32 %s17, 1
      %s25 = ssub.s32 %s17, %s24
      %p26 = scmp.eq.s32.totalorder %s25, 0
      %s28 = sadd.s32 %s27, 1
      %s29 = scalar_select %p26, %s27, %s28
      %p32 = pneg %p26
      %p33 = scmp.eq.s32.totalorder %s17, 1
      %p34 = por %p32, %p33
      %p35 = scmp.ne.s32.totalorder %s27, %s30
      %p36 = scmp.eq.s32.totalorder %s17, 0
      %p37 = por %p35, %p36
      %p38 = scmp.ne.s32.totalorder %s27, %s30
      %p39 = scmp.eq.s32.totalorder %s22, 1
      %p40 = por %p38, %p39
      %p41 = scmp.ne.s32.totalorder %s30, %s31
      %p42 = scmp.eq.s32.totalorder %s22, 0
      %p43 = por %p41, %p42
      %p44 = scmp.ne.s32.totalorder %s30, %s31
      %p45 = scmp.eq.s32.totalorder %s23, 1
      %p46 = por %p44, %p45
      %p48 = scmp.ne.s32.totalorder %s31, %s47
      %p49 = scmp.eq.s32.totalorder %s23, 0
      %p50 = por %p48, %p49
      %s52 = sadd.s32 %s51, 1
      %p55 = scmp.eq.s32.totalorder %s17, 1
      %p56 = scmp.ne.s32.totalorder %s51, %s53
      %p57 = scmp.eq.s32.totalorder %s17, 0
      %p58 = por %p56, %p57
      %p59 = scmp.ne.s32.totalorder %s51, %s53
      %p60 = scmp.eq.s32.totalorder %s22, 1
      %p61 = por %p59, %p60
      %p62 = scmp.ne.s32.totalorder %s53, %s54
      %p63 = scmp.eq.s32.totalorder %s22, 0
      %p64 = por %p62, %p63
      %p65 = scmp.ne.s32.totalorder %s53, %s54
      %p66 = scmp.eq.s32.totalorder %s23, 1
      %p67 = por %p65, %p66
      %p69 = scmp.ne.s32.totalorder %s54, %s68
      %p70 = scmp.eq.s32.totalorder %s23, 0
      %p71 = por %p69, %p70
      %s73 = sadd.s32 %s72, 1
      %p76 = scmp.eq.s32.totalorder %s17, 1
      %p77 = scmp.ne.s32.totalorder %s72, %s74
      %p78 = scmp.eq.s32.totalorder %s17, 0
      %p79 = por %p77, %p78
      %p80 = scmp.ne.s32.totalorder %s72, %s74
      %p81 = scmp.eq.s32.totalorder %s22, 1
      %p82 = por %p80, %p81
      %p83 = scmp.ne.s32.totalorder %s74, %s75
      %p84 = scmp.eq.s32.totalorder %s22, 0
      %p85 = por %p83, %p84
      %p86 = scmp.ne.s32.totalorder %s74, %s75
      %p87 = scmp.eq.s32.totalorder %s23, 1
      %p88 = por %p86, %p87
      %p90 = scmp.ne.s32.totalorder %s75, %s89
      %p91 = scmp.eq.s32.totalorder %s23, 0
      %p92 = por %p90, %p91
      %s94 = sadd.s32 %s93, 1
      %p97 = scmp.eq.s32.totalorder %s17, 1
      %p98 = scmp.ne.s32.totalorder %s93, %s95
      %p99 = scmp.eq.s32.totalorder %s17, 0
      %p100 = por %p98, %p99
      %p101 = scmp.ne.s32.totalorder %s93, %s95
      %p102 = scmp.eq.s32.totalorder %s22, 1
      %p103 = por %p101, %p102
      %p104 = scmp.ne.s32.totalorder %s95, %s96
      %p105 = scmp.eq.s32.totalorder %s22, 0
      %p106 = por %p104, %p105
      %p107 = scmp.ne.s32.totalorder %s95, %s96
      %p108 = scmp.eq.s32.totalorder %s23, 1
      %p109 = por %p107, %p108
      %p111 = scmp.ne.s32.totalorder %s96, %s110
      %p112 = scmp.eq.s32.totalorder %s23, 0
      %p113 = por %p111, %p112
      %s114 = ssub.s32 %s17, %s24
      %p115 = scmp.eq.s32.totalorder %s114, 0
      %s117 = sadd.s32 %s116, 1
      %s118 = scalar_select %p115, %s116, %s117
      %p121 = pneg %p115
      %p122 = scmp.eq.s32.totalorder %s17, 1
      %p123 = por %p121, %p122
      %p124 = scmp.ne.s32.totalorder %s116, %s119
      %p125 = scmp.eq.s32.totalorder %s17, 0
      %p126 = por %p124, %p125
      %p127 = scmp.ne.s32.totalorder %s116, %s119
      %p128 = scmp.eq.s32.totalorder %s22, 1
      %p129 = por %p127, %p128
      %p130 = scmp.ne.s32.totalorder %s119, %s120
      %p131 = scmp.eq.s32.totalorder %s22, 0
      %p132 = por %p130, %p131
      %p133 = scmp.ne.s32.totalorder %s119, %s120
      %p134 = scmp.eq.s32.totalorder %s23, 1
      %p135 = por %p133, %p134
      %p137 = scmp.ne.s32.totalorder %s120, %s136
      %p138 = scmp.eq.s32.totalorder %s23, 0
      %p139 = por %p137, %p138
      %p140 = scmp.le.s32.totalorder 1, %s17
      %p141 = scmp.lt.s32.totalorder %s17, 3
      %p142 = pnand %p140, %p141
      %p143 = pneg %p142
      // Predicated region
      $region9: #{tpu_custom_call.1} parent=5 // pred_check
        _
      $region10: #{tpu_custom_call.1} parent=5 // pred_check_branch
        %145 = sbr.rel (%p142) target = $region12
      $region11: #{tpu_custom_call.1} parent=5 // pred_region
        %s146 = ssub.s32 %s17, 1
        // Predicated region
        $region13: #{tpu_custom_call.1} parent=11 // pred_check
          %p147 = pneg %p64
        $region14: #{tpu_custom_call.1} parent=11 // pred_check_branch
          %149 = sbr.rel (%p147) target = $region16
        $region15: #{tpu_custom_call.1} parent=11 // pred_region
          %s151 = ssub.s32 256, 256
          %152 = vsyncadd [#allocation6], %s151
          %s153 = sshll.u32 [#allocation5], 4
          %s154 = int_to_ptr.vmem [resolvable:$true] %s153
          %159 = dma.hbm_to_vmem [thread:$0]  %s1, 256, %s154, [#allocation6], 128, 128, 8
        $region16: #{tpu_custom_call.1} parent=11 // pred_fallthru
          _
        // Predicated region
        $region17: #{tpu_custom_call.1} parent=11 // pred_check
          %p160 = pneg %p85
        $region18: #{tpu_custom_call.1} parent=11 // pred_check_branch
          %162 = sbr.rel (%p160) target = $region20
        $region19: #{tpu_custom_call.1} parent=11 // pred_region
          _
        $region20: #{tpu_custom_call.1} parent=11 // pred_fallthru
          _
        // Predicated region
        $region21: #{tpu_custom_call.1} parent=11 // pred_check
          %p163 = pneg %p106
        $region22: #{tpu_custom_call.1} parent=11 // pred_check_branch
          %165 = sbr.rel (%p163) target = $region24
        $region23: #{tpu_custom_call.1} parent=11 // pred_region
          _
        $region24: #{tpu_custom_call.1} parent=11 // pred_fallthru
          _
      $region12: #{tpu_custom_call.1} parent=5 // pred_fallthru
        _
      %p166 = scmp.lt.s32.totalorder %s17, 2
      // Predicated region
      $region25: #{tpu_custom_call.1} parent=5 // pred_check
        %p167 = pneg %p166
      $region26: #{tpu_custom_call.1} parent=5 // pred_check_branch
        %169 = sbr.rel (%p167) target = $region28
      $region27: #{tpu_custom_call.1} parent=5 // pred_region
        // Predicated region
        $region29: #{tpu_custom_call.1} parent=27 // pred_check
          %p170 = pneg %p37
        $region30: #{tpu_custom_call.1} parent=27 // pred_check_branch
          %172 = sbr.rel (%p170) target = $region32
        $region31: #{tpu_custom_call.1} parent=27 // pred_region
          %s173 = sand.u32 %s27, 1
          %s174 = scalar_lea.sflag [#allocation3], %s173
          %s175 = sand.u32 %s27, 1
          %s176 = smul.addr %s175, 16
          %s177 = scalar_lea.vmem [#allocation2], %s176
          %s179 = ssub.s32 256, 256
          %180 = vsyncadd %s174, %s179
          %s181 = smul.addr %s17, 2
          %s182 = smul.addr %s181, 128
          %s183 = scalar_lea.hbm %s0, %s182
          %s184 = sshll.u32 %s177, 4
          %s185 = int_to_ptr.vmem [resolvable:$true] %s184
          %190 = dma.hbm_to_vmem [thread:$0]  %s183, 256, %s185, %s174, 128, 128, 8
        $region32: #{tpu_custom_call.1} parent=27 // pred_fallthru
          _
      $region28: #{tpu_custom_call.1} parent=5 // pred_fallthru
        _
      %p191 = scmp.le.s32.totalorder 1, %s17
      %p192 = scmp.lt.s32.totalorder %s17, 3
      %p193 = pnand %p191, %p192
      %p194 = pneg %p193
      // Predicated region
      $region33: #{tpu_custom_call.1} parent=5 // pred_check
        _
      $region34: #{tpu_custom_call.1} parent=5 // pred_check_branch
        %196 = sbr.rel (%p193) target = $region36
      $region35: #{tpu_custom_call.1} parent=5 // pred_region
        %s197 = ssub.s32 %s17, 1
        %s198 = sand.u32 %s30, 1
        %s199 = scalar_lea.sflag [#allocation3], %s198
        %s200 = sand.u32 %s30, 1
        %s201 = smul.addr %s200, 16
        %s202 = scalar_lea.vmem [#allocation2], %s201
        // Predicated region
        $region37: #{tpu_custom_call.1} parent=35 // pred_check
          %p203 = pneg %p43
        $region38: #{tpu_custom_call.1} parent=35 // pred_check_branch
          %205 = sbr.rel (%p203) target = $region40
        $region39: #{tpu_custom_call.1} parent=35 // pred_region
          %206 = dma.done %s199, 256
        $region40: #{tpu_custom_call.1} parent=35 // pred_fallthru
          _
        // Predicated region
        $region41: #{tpu_custom_call.1} parent=35 // pred_check
          %p207 = pneg %p64
        $region42: #{tpu_custom_call.1} parent=35 // pred_check_branch
          %209 = sbr.rel (%p207) target = $region44
        $region43: #{tpu_custom_call.1} parent=35 // pred_region
          %210 = dma.done [#allocation6], 256
        $region44: #{tpu_custom_call.1} parent=35 // pred_fallthru
          _
        %s211 = sand.u32 %s30, 1
        %s212 = scalar_lea.sflag [#allocation3], %s211
        %s213 = sand.u32 %s30, 1
        %s214 = smul.addr %s213, 16
        %s215 = scalar_lea.vmem [#allocation2], %s214
        %p216 = pneg %p43
        %p217 = pneg %p40
        %p218 = pneg %p64
        %p219 = pneg %p61
        %p220 = pneg %p85
        %p221 = pneg %p82
        %p222 = pneg %p106
        %p223 = pneg %p103
        %p224 = pneg %p132
        %p225 = pneg %p129
        %s226 = sand.u32 %s119, 1
        %s227 = scalar_lea.sflag [#allocation4], %s226
        %s228 = sand.u32 %s119, 1
        %s229 = smul.addr %s228, 8
        %s230 = scalar_lea.vmem [#allocation7], %s229
        %v231 = vld [vmem:[%s202] sm:$0xff]
        %v232 = vld [vmem:[%s202 + $0x8] sm:$0xff]
        %v233 = vld [vmem:[#allocation5] sm:$0xff]
        %v234 = vld [vmem:[#allocation5 + $0x8] sm:$0xff]
        %v235 = vadd.f32 %v231, %v233
        %v236 = vadd.f32 %v232, %v234
        %vm237 = vcmask 261120
        %v238 = vsel %vm237, %v235, 0.0
        %239 = vadd.xlane.f32.xlu0 %v238
        %v240 = vpop.xlane.xlu0 %239
        %v241 = vsel %vm237, %v236, 0.0
        %242 = vadd.xlane.f32.xlu0 %v241
        %v243 = vpop.xlane.xlu0 %242
        %v244 = vrcp.pop 32.0
        %v245 = vmul.f32 %v240, %v244
        %v246 = vmul.f32 %v243, %v244
        %v247 = vmul.f32 %v235, %v235
        %v248 = vmul.f32 %v236, %v236
        %v249 = vsel %vm237, %v247, 0.0
        %250 = vadd.xlane.f32.xlu0 %v249
        %v251 = vpop.xlane.xlu0 %250
        %v252 = vsel %vm237, %v248, 0.0
        %253 = vadd.xlane.f32.xlu0 %v252
        %v254 = vpop.xlane.xlu0 %253
        %v255 = vmul.f32 %v251, %v244
        %v256 = vmul.f32 %v254, %v244
        %v257 = vmul.f32 %v245, %v245
        %v258 = vmul.f32 %v246, %v246
        %v259 = vsub.f32 %v255, %v257
        %v260 = vsub.f32 %v256, %v258
        %v261 = vsub.f32 %v235, %v245
        %v262 = vsub.f32 %v236, %v246
        %v263 = vadd.f32 %v259, 1e-12
        %v264 = vadd.f32 %v260, 1e-12
        %v265 = vrsqrt.pop %v263
        %v266 = vrsqrt.pop %v264
        %v267 = vmul.f32 %v261, %v265
        %v268 = vmul.f32 %v262, %v266
        %v269 = vld [vmem:[%s2] sm:$0x1]
        %v271 = vlaneseq
        %v272 = vshrl.u32 %v271, 7
        %v273 = vsub.s32 0, %v272
        %v274 = vrot.slane %v269, %v273
        %v276 = vmul.f32 %v267, %v274
        %v277 = vmul.f32 %v268, %v274
        %v278 = vld [vmem:[%s3] sm:$0x1]
        %v280 = vlaneseq
        %v281 = vshrl.u32 %v280, 7
        %v282 = vsub.s32 0, %v281
        %v283 = vrot.slane %v278, %v282
        %v285 = vadd.f32 %v276, %v283
        %v286 = vadd.f32 %v277, %v283
        %v287 = vpack.c.bf16 %v286, %v285
        %v289 = vunpack.c.l.b16 %v287
        %v290 = vunpack.c.h.b16 %v287
        %v291 = vpack.c.b16 %v289, %v289
        %v292 = vpack.c.b16 %v290, %v290
        %vm295 = vcmask 257024
        %296 = vst.msk [vmem:[%s230] sm:$0xf] %vm295, %v291
        %297 = vst.msk [vmem:[%s230 + $0x4] sm:$0xf] %vm295, %v292
        %s298 = sand.u32 %s119, 1
        %s299 = scalar_lea.sflag [#allocation4], %s298
        %s300 = sand.u32 %s119, 1
        %s301 = smul.addr %s300, 8
        %s302 = scalar_lea.vmem [#allocation7], %s301
        // Predicated region
        $region45: #{tpu_custom_call.1} parent=35 // pred_check
          %p303 = pneg %p129
        $region46: #{tpu_custom_call.1} parent=35 // pred_check_branch
          %305 = sbr.rel (%p303) target = $region48
        $region47: #{tpu_custom_call.1} parent=35 // pred_region
          %s307 = ssub.s32 128, 128
          %308 = vsyncadd %s299, %s307
          %s309 = smul.addr %s22, 2
          %s310 = smul.addr %s309, 64
          %s311 = scalar_lea.hbm %s4, %s310
          %s312 = sshll.u32 %s302, 4
          %s313 = int_to_ptr.vmem [resolvable:$true] %s312
          %318 = dma.vmem_to_hbm [thread:$0]  %s313, 128, %s311, %s299, 64, 64, 4
        $region48: #{tpu_custom_call.1} parent=35 // pred_fallthru
          _
      $region36: #{tpu_custom_call.1} parent=5 // pred_fallthru
        _
      %p319 = scmp.le.s32.totalorder 2, %s17
      // Predicated region
      $region49: #{tpu_custom_call.1} parent=5 // pred_check
        %p320 = pneg %p319
      $region50: #{tpu_custom_call.1} parent=5 // pred_check_branch
        %322 = sbr.rel (%p320) target = $region52
      $region51: #{tpu_custom_call.1} parent=5 // pred_region
        %s323 = ssub.s32 %s17, 2
        // Predicated region
        $region53: #{tpu_custom_call.1} parent=51 // pred_check
          %p324 = pneg %p135
        $region54: #{tpu_custom_call.1} parent=51 // pred_check_branch
          %326 = sbr.rel (%p324) target = $region56
        $region55: #{tpu_custom_call.1} parent=51 // pred_region
          %s327 = sand.u32 %s120, 1
          %s328 = scalar_lea.sflag [#allocation4], %s327
          %s329 = sand.u32 %s120, 1
          %s330 = smul.addr %s329, 8
          %s331 = scalar_lea.vmem [#allocation7], %s330
          %332 = dma.done %s328, 128
        $region56: #{tpu_custom_call.1} parent=51 // pred_fallthru
          _
      $region52: #{tpu_custom_call.1} parent=5 // pred_fallthru
        _
    $region6: #{tpu_custom_call.1} parent=1 // loop_footer
      %s21 = sadd.s32 1, %s17
    $region7: #{tpu_custom_call.1} parent=1 // loop_footer_branch
      %16 = sbr.rel target = $region3
    $region8: #{tpu_custom_call.1} parent=1 // loop_exit
      _
    %333 = vsyncpa [#allocation3], 1
    %s334 = scalar_lea.sflag [#allocation3], 1
    %335 = vsyncpa %s334, 1
    %336 = vsyncpa [#allocation6], 1
    %337 = vsyncpa [#allocation4], 1
    %s338 = scalar_lea.sflag [#allocation4], 1
    %339 = vsyncpa %s338, 1

</llo_original>
